<compile_context>
chip_gen: v6e
topology: v6e:2x2x1
jax: 0.10.0
libtpu: 0.0.40
codegen_flags: <defaults>
</compile_context>

<pallas_src>
import math
import functools

import jax
import jax.numpy as jnp
from jax.experimental import pallas as pl
from jax.experimental.pallas import tpu as pltpu

LN_EPS = 1e-5
BN_EPS = 1e-5
_VMEM_LIMIT = 48 * 1024 * 1024


# ----------------------------------------------------------------------------
# Shared math helpers (used both inside Pallas kernels and in the pure-JAX ref,
# so kernel and reference numerics match exactly).
# ----------------------------------------------------------------------------
def _mm(a, w):
    """Matmul with bf16 MXU operands, f32 accumulation."""
    return jnp.dot(a.astype(jnp.bfloat16), w.astype(jnp.bfloat16),
                   preferred_element_type=jnp.float32)


def _sigmoid(x):
    # exp hits the EUP; explicit formula keeps f32 VPU math (important on v5e).
    return 1.0 / (1.0 + jnp.exp(-x))


def _silu(x):
    return x * _sigmoid(x)


def _layer_norm(x, gamma, beta, eps=LN_EPS):
    mu = jnp.mean(x, axis=-1, keepdims=True)
    var = jnp.mean(jnp.square(x - mu), axis=-1, keepdims=True)
    return (x - mu) * jax.lax.rsqrt(var + eps) * gamma + beta


def _ffn_math(x, g, b, w1, b1, w2, b2):
    """x + 0.5 * Linear2(SiLU(Linear1(LN(x))))  (dropout = identity)."""
    h = _layer_norm(x, g, b)
    h = _mm(h, w1) + b1
    h = _silu(h)
    y = _mm(h, w2) + b2
    # TODO(synk): training-mode dropout (p=0.1) not implemented; inference semantics.
    return x + 0.5 * y


def _attn_math(xq, xkv, g, b, wq, bq, wk, bk, wv, bv, wo, bo, *,
               num_heads, valid_len):
    """xq + OutProj(MHSA(LN(xq), LN(xkv))) for one sequence.

    xq: (Tq, D) query tile, xkv: (Tk, D) full (possibly padded) sequence.
    Keys/values at positions >= valid_len are masked out of the softmax.
    Heads are processed with batched einsums and a single full-D out-projection.
    """
    Tq, D = xq.shape
    Tk = xkv.shape[0]
    hd = D // num_heads
    scale = 1.0 / math.sqrt(hd)

    qn = _layer_norm(xq, g, b)
    kn = _layer_norm(xkv, g, b)
    q = _mm(qn, wq) + bq
    k = _mm(kn, wk) + bk
    v = _mm(kn, wv) + bv

    def split_heads(m):
        return jnp.stack(
            [m[:, h * hd:(h + 1) * hd] for h in range(num_heads)], axis=0)

    qh = split_heads(q) * scale            # (H, Tq, hd)
    kh = split_heads(k)                    # (H, Tk, hd)
    vh = split_heads(v)                    # (H, Tk, hd)

    s = jnp.einsum('hqd,hkd->hqk', qh.astype(jnp.bfloat16),
                   kh.astype(jnp.bfloat16),
                   preferred_element_type=jnp.float32)   # (H, Tq, Tk)
    if valid_len < Tk:                                    # mask padded keys
        col = jax.lax.broadcasted_iota(jnp.int32, s.shape, 2)
        s = jnp.where(col < valid_len, s, -1e30)
    s = s - jnp.max(s, axis=-1, keepdims=True)
    p = jnp.exp(s)
    p = p * (1.0 / jnp.sum(p, axis=-1, keepdims=True))

    o = jnp.einsum('hqk,hkd->hqd', p.astype(jnp.bfloat16),
                   vh.astype(jnp.bfloat16),
                   preferred_element_type=jnp.float32)    # (H, Tq, hd)
    o = jnp.concatenate([o[h] for h in range(num_heads)], axis=-1)  # (Tq, D)
    # Single full-width output projection (contraction width = D, not head_dim).
    out = _mm(o, wo) + bo
    # TODO(synk): attention-weight dropout (p=0.1) not implemented (inference).
    return xq + out


def _conv_module_math(x, ln_g, ln_b, w1, b1, wdw, bdw, bn_g, bn_b, bn_m, bn_v,
                      w2, b2, *, kernel_size):
    """ConformerConvModule on a (T, D) sequence (channel-last)."""
    T, D = x.shape
    P = (kernel_size - 1) // 2

    h = _layer_norm(x, ln_g, ln_b)
    h = _mm(h, w1) + b1                    # pointwise conv1 (kernel=1 == linear)
    half = h.shape[-1] // 2
    g2 = h[..., :half] * _sigmoid(h[..., half:])          # GLU over channels

    # Depthwise conv over time ("same" padding) on VALUES: zero-extend once,
    # take the K taps as static slices (sublane shifts go to the XLU), pure
    # VPU FMA accumulation.  dw weights loaded once above the tap loop.
    zeros = jnp.zeros((P, D), jnp.float32)
    gp = jnp.concatenate([zeros, g2, zeros], axis=0)       # (T + 2P, D)
    acc = jnp.zeros((T, D), jnp.float32)
    for kk in range(kernel_size):          # unrolled tap loop (K = 31)
        acc = acc + gp[kk:kk + T, :] * wdw[kk:kk + 1, :]
    acc = acc + bdw

    bn = (acc - bn_m) * jax.lax.rsqrt(bn_v + BN_EPS) * bn_g + bn_b
    act = _silu(bn)
    out = _mm(act, w2) + b2                # pointwise conv2
    # TODO(synk): dropout identity (inference semantics).
    return x + out


# ----------------------------------------------------------------------------
# Kernels
# ----------------------------------------------------------------------------
def _ffn_kernel(x_ref, g_ref, b_ref, w1_ref, b1_ref, w2_ref, b2_ref, o_ref):
    o_ref[0] = _ffn_math(x_ref[0], g_ref[...], b_ref[...], w1_ref[...],
                         b1_ref[...], w2_ref[...], b2_ref[...]).astype(o_ref.dtype)


def _attn_kernel(xq_ref, xkv_ref, g_ref, b_ref, wq_ref, bq_ref, wk_ref, bk_ref,
                 wv_ref, bv_ref, wo_ref, bo_ref, o_ref, *, num_heads, valid_len):
    y = _attn_math(xq_ref[0], xkv_ref[0], g_ref[...], b_ref[...],
                   wq_ref[...], bq_ref[...], wk_ref[...], bk_ref[...],
                   wv_ref[...], bv_ref[...], wo_ref[...], bo_ref[...],
                   num_heads=num_heads, valid_len=valid_len)
    o_ref[0] = y.astype(o_ref.dtype)


def _conv_ffn_kernel(x_ref, cg_ref, cb_ref, cw1_ref, cb1_ref, wdw_ref, bdw_ref,
                     bng_ref, bnb_ref, bnm_ref, bnv_ref, cw2_ref, cb2_ref,
                     fg_ref, fb_ref, fw1_ref, fb1_ref, fw2_ref, fb2_ref,
                     lng_ref, lnb_ref, o_ref, *, kernel_size):
    x = x_ref[0]                                           # (T, D)
    y = _conv_module_math(x, cg_ref[...], cb_ref[...], cw1_ref[...],
                          cb1_ref[...], wdw_ref[...], bdw_ref[...],
                          bng_ref[...], bnb_ref[...], bnm_ref[...],
                          bnv_ref[...], cw2_ref[...], cb2_ref[...],
                          kernel_size=kernel_size)
    y = _ffn_math(y, fg_ref[...], fb_ref[...], fw1_ref[...], fb1_ref[...],
                  fw2_ref[...], fb2_ref[...])
    o_ref[0] = _layer_norm(y, lng_ref[...], lnb_ref[...]).astype(o_ref.dtype)


# ----------------------------------------------------------------------------
# Tiling helpers
# ----------------------------------------------------------------------------
def _round_up(v, m):
    return ((v + m - 1) // m) * m


def _choose_tile(T, max_tile):
    """Return (padded T, tile) with tile | padded_T, tile % 8 == 0, tile <= max_tile."""
    Tp = _round_up(max(T, 8), 8)
    top = min(_round_up(max_tile, 8), Tp)
    tile = 8
    for cand in range(top, 7, -8):
        if Tp % cand == 0:
            tile = cand
            break
    return Tp, tile


def _pad_time(x, Tp):
    T = x.shape[1]
    if Tp == T:
        return x
    return jnp.pad(x, ((0, 0), (0, Tp - T), (0, 0)))


# ----------------------------------------------------------------------------
# pallas_call wrappers
# ----------------------------------------------------------------------------
def _ffn_call(x, g, b, w1, b1, w2, b2, *, t_tile=256):
    B, T, D = x.shape
    Dff = w1.shape[1]
    Tp, tt = _choose_tile(T, t_tile)
    x_in = _pad_time(x, Tp)
    grid = (B, Tp // tt)

    def rep(shape):                        # grid-invariant parameter block
        return pl.BlockSpec(shape, lambda bi, ti: (0,) * len(shape))

    out = pl.pallas_call(
        _ffn_kernel,
        out_shape=jax.ShapeDtypeStruct((B, Tp, D), x.dtype),
        grid_spec=pltpu.PrefetchScalarGridSpec(
            num_scalar_prefetch=0,
            grid=grid,
            in_specs=[pl.BlockSpec((1, tt, D), lambda bi, ti: (bi, ti, 0)),
                      rep((1, D)), rep((1, D)), rep((D, Dff)), rep((1, Dff)),
                      rep((Dff, D)), rep((1, D))],
            out_specs=pl.BlockSpec((1, tt, D), lambda bi, ti: (bi, ti, 0)),
        ),
        compiler_params=pltpu.CompilerParams(
            dimension_semantics=("parallel", "parallel"),
            vmem_limit_bytes=_VMEM_LIMIT),
    )(x_in, g, b, w1.astype(jnp.bfloat16), b1, w2.astype(jnp.bfloat16), b2)
    return out[:, :T, :] if Tp != T else out


def _attn_call(x, p, *, q_tile=512):
    B, T, D = x.shape
    H = p["num_heads"]
    Tp, tq = _choose_tile(T, q_tile)
    x_in = _pad_time(x, Tp)
    grid = (B, Tp // tq)

    kernel = functools.partial(_attn_kernel, num_heads=H, valid_len=T)

    def rep(shape):
        return pl.BlockSpec(shape, lambda bi, qi: (0,) * len(shape))

    wq = p["wq"].astype(jnp.bfloat16)
    wk = p["wk"].astype(jnp.bfloat16)
    wv = p["wv"].astype(jnp.bfloat16)
    wo = p["wo"].astype(jnp.bfloat16)

    out = pl.pallas_call(
        kernel,
        out_shape=jax.ShapeDtypeStruct((B, Tp, D), x.dtype),
        grid_spec=pltpu.PrefetchScalarGridSpec(
            num_scalar_prefetch=0,
            grid=grid,
            in_specs=[pl.BlockSpec((1, tq, D), lambda bi, qi: (bi, qi, 0)),
                      pl.BlockSpec((1, Tp, D), lambda bi, qi: (bi, 0, 0)),
                      rep((1, D)), rep((1, D)),
                      rep((D, D)), rep((1, D)), rep((D, D)), rep((1, D)),
                      rep((D, D)), rep((1, D)), rep((D, D)), rep((1, D))],
            out_specs=pl.BlockSpec((1, tq, D), lambda bi, qi: (bi, qi, 0)),
        ),
        compiler_params=pltpu.CompilerParams(
            dimension_semantics=("parallel", "parallel"),
            vmem_limit_bytes=_VMEM_LIMIT),
    )(x_in, x_in, p["attn_g"], p["attn_b"], wq, p["bq"], wk, p["bk"],
      wv, p["bv"], wo, p["bo"])
    return out[:, :T, :] if Tp != T else out


def _conv_ffn_call(x, p):
    B, T, D = x.shape
    K = p["conv_kernel"]
    Dc = p["conv_w1"].shape[1]
    Dff = p["ff2_w1"].shape[1]
    kernel = functools.partial(_conv_ffn_kernel, kernel_size=K)

    def rep(shape):
        return pl.BlockSpec(shape, lambda bi: (0,) * len(shape))

    return pl.pallas_call(
        kernel,
        out_shape=jax.ShapeDtypeStruct((B, T, D), x.dtype),
        grid_spec=pltpu.PrefetchScalarGridSpec(
            num_scalar_prefetch=0,
            grid=(B,),
            in_specs=[pl.BlockSpec((1, T, D), lambda bi: (bi, 0, 0)),
                      rep((1, D)), rep((1, D)),
                      rep((D, Dc)), rep((1, Dc)),
                      rep((K, D)), rep((1, D)),
                      rep((1, D)), rep((1, D)), rep((1, D)), rep((1, D)),
                      rep((D, D)), rep((1, D)),
                      rep((1, D)), rep((1, D)),
                      rep((D, Dff)), rep((1, Dff)),
                      rep((Dff, D)), rep((1, D)),
                      rep((1, D)), rep((1, D))],
            out_specs=pl.BlockSpec((1, T, D), lambda bi: (bi, 0, 0)),
        ),
        compiler_params=pltpu.CompilerParams(
            dimension_semantics=("parallel",),
            vmem_limit_bytes=_VMEM_LIMIT),
    )(x, p["conv_ln_g"], p["conv_ln_b"],
      p["conv_w1"].astype(jnp.bfloat16), p["conv_b1"],
      p["conv_wdw"], p["conv_bdw"],
      p["bn_g"], p["bn_b"], p["bn_mean"], p["bn_var"],
      p["conv_w2"].astype(jnp.bfloat16), p["conv_b2"],
      p["ff2_g"], p["ff2_b"],
      p["ff2_w1"].astype(jnp.bfloat16), p["ff2_b1"],
      p["ff2_w2"].astype(jnp.bfloat16), p["ff2_b2"],
      p["final_g"], p["final_b"])


def conformer_block_forward(x, p, *, t_tile=256, q_tile=512):
    x = _ffn_call(x, p["ff1_g"], p["ff1_b"], p["ff1_w1"], p["ff1_b1"],
                  p["ff1_w2"], p["ff1_b2"], t_tile=t_tile)
    x = _attn_call(x, p, q_tile=q_tile)
    x = _conv_ffn_call(x, p)
    return x


# ----------------------------------------------------------------------------
# Pure-JAX reference (same math helpers, XLA-lowered) and parameter init
# ----------------------------------------------------------------------------
def _reference(x, p):
    x = _ffn_math(x, p["ff1_g"], p["ff1_b"], p["ff1_w1"], p["ff1_b1"],
                  p["ff1_w2"], p["ff1_b2"])

    def attn_fn(xb):
        return _attn_math(xb, xb, p["attn_g"], p["attn_b"], p["wq"], p["bq"],
                          p["wk"], p["bk"], p["wv"], p["bv"], p["wo"], p["bo"],
                          num_heads=p["num_heads"], valid_len=xb.shape[0])

    x = jax.vmap(attn_fn)(x)

    def conv_fn(xb):
        return _conv_module_math(xb, p["conv_ln_g"], p["conv_ln_b"],
                                 p["conv_w1"], p["conv_b1"], p["conv_wdw"],
                                 p["conv_bdw"], p["bn_g"], p["bn_b"],
                                 p["bn_mean"], p["bn_var"], p["conv_w2"],
                                 p["conv_b2"], kernel_size=p["conv_kernel"])

    x = jax.vmap(conv_fn)(x)
    x = _ffn_math(x, p["ff2_g"], p["ff2_b"], p["ff2_w1"], p["ff2_b1"],
                  p["ff2_w2"], p["ff2_b2"])
    return _layer_norm(x, p["final_g"], p["final_b"])


def init_params(key, D, H, ff_exp, conv_exp, K):
    assert D % H == 0 and conv_exp == 2
    Dff = D * ff_exp
    Dc = D * conv_exp
    keys = iter(jax.random.split(key, 64))

    def nrm(shape, scale=0.1):
        return scale * jax.random.normal(next(keys), shape, dtype=jnp.float32)

    def gamma(shape):
        return jnp.ones(shape, jnp.float32) + nrm(shape, 0.05)

    p = {"num_heads": H, "conv_kernel": K}
    p["ff1_g"], p["ff1_b"] = gamma((1, D)), nrm((1, D))
    p["ff1_w1"], p["ff1_b1"] = nrm((D, Dff)), nrm((1, Dff))
    p["ff1_w2"], p["ff1_b2"] = nrm((Dff, D)), nrm((1, D))

    p["attn_g"], p["attn_b"] = gamma((1, D)), nrm((1, D))
    p["wq"], p["bq"] = nrm((D, D)), nrm((1, D))
    p["wk"], p["bk"] = nrm((D, D)), nrm((1, D))
    p["wv"], p["bv"] = nrm((D, D)), nrm((1, D))
    p["wo"], p["bo"] = nrm((D, D)), nrm((1, D))

    p["conv_ln_g"], p["conv_ln_b"] = gamma((1, D)), nrm((1, D))
    p["conv_w1"], p["conv_b1"] = nrm((D, Dc)), nrm((1, Dc))
    p["conv_wdw"], p["conv_bdw"] = nrm((K, D)), nrm((1, D))
    p["bn_g"], p["bn_b"] = gamma((1, D)), nrm((1, D))
    p["bn_mean"] = nrm((1, D))
    p["bn_var"] = jnp.ones((1, D), jnp.float32) + 0.1 * jnp.abs(
        jax.random.normal(next(keys), (1, D), dtype=jnp.float32))
    p["conv_w2"], p["conv_b2"] = nrm((D, D)), nrm((1, D))

    p["ff2_g"], p["ff2_b"] = gamma((1, D)), nrm((1, D))
    p["ff2_w1"], p["ff2_b1"] = nrm((D, Dff)), nrm((1, Dff))
    p["ff2_w2"], p["ff2_b2"] = nrm((Dff, D)), nrm((1, D))

    p["final_g"], p["final_b"] = gamma((1, D)), nrm((1, D))
    return p


if __name__ == "__main__":
    key = jax.random.PRNGKey(0)
    B, T, D, H = 2, 16, 32, 8          # batch, time, d_model, heads (head_dim = 4)
    FF_EXP, CONV_EXP, K = 4, 2, 31
    pkey, xkey = jax.random.split(key)
    params = init_params(pkey, D, H, FF_EXP, CONV_EXP, K)
    x = jax.random.normal(xkey, (B, T, D), dtype=jnp.float32)

    out = conformer_block_forward(x, params)
    out = jax.block_until_ready(out)

    ref = jax.block_until_ready(_reference(x, params))
    assert out.shape == (B, T, D)
    max_err = float(jnp.max(jnp.abs(out - ref)))
    assert jnp.allclose(out, ref, atol=2e-3, rtol=2e-3), f"max_err={max_err}"

    print("KERNEL_OK")
</pallas_src>

<mosaic_0001>
module attributes {stable_mosaic.version = 11 : i64} {
  func.func @_ffn_kernel(%arg0: i32, %arg1: i32, %arg2: memref<1x16x32xf32, #tpu.memory_space<vmem>>, %arg3: memref<1x32xf32, #tpu.memory_space<vmem>>, %arg4: memref<1x32xf32, #tpu.memory_space<vmem>>, %arg5: memref<32x128xbf16, #tpu.memory_space<vmem>>, %arg6: memref<1x128xf32, #tpu.memory_space<vmem>>, %arg7: memref<128x32xbf16, #tpu.memory_space<vmem>>, %arg8: memref<1x32xf32, #tpu.memory_space<vmem>>, %arg9: memref<1x16x32xf32, #tpu.memory_space<vmem>>) attributes {dimension_semantics = [#tpu.dimension_semantics<parallel>, #tpu.dimension_semantics<parallel>], iteration_bounds = array<i64: 2, 1>, scalar_prefetch = 0 : i64, scratch_operands = 0 : i64, tpu.core_type = #tpu.core_type<tc>, window_params = [{transform_indices = @transform_0, window_bounds = array<i64: 1, 16, 32>}, {pipeline_mode = #tpu.pipeline_mode<synchronous>, transform_indices = @transform_1, window_bounds = array<i64: 1, 32>}, {pipeline_mode = #tpu.pipeline_mode<synchronous>, transform_indices = @transform_2, window_bounds = array<i64: 1, 32>}, {pipeline_mode = #tpu.pipeline_mode<synchronous>, transform_indices = @transform_3, window_bounds = array<i64: 32, 128>}, {pipeline_mode = #tpu.pipeline_mode<synchronous>, transform_indices = @transform_4, window_bounds = array<i64: 1, 128>}, {pipeline_mode = #tpu.pipeline_mode<synchronous>, transform_indices = @transform_5, window_bounds = array<i64: 128, 32>}, {pipeline_mode = #tpu.pipeline_mode<synchronous>, transform_indices = @transform_6, window_bounds = array<i64: 1, 32>}, {transform_indices = @transform_7, window_bounds = array<i64: 1, 16, 32>}]} {
    %c0 = arith.constant 0 : index
    %c0_0 = arith.constant 0 : index
    %c0_1 = arith.constant 0 : index
    %0 = vector.load %arg2[%c0, %c0_0, %c0_1] : memref<1x16x32xf32, #tpu.memory_space<vmem>>, vector<1x16x32xf32>
    %1 = vector.shape_cast %0 : vector<1x16x32xf32> to vector<16x32xf32>
    %c0_2 = arith.constant 0 : index
    %c0_3 = arith.constant 0 : index
    %2 = vector.load %arg3[%c0_2, %c0_3] : memref<1x32xf32, #tpu.memory_space<vmem>>, vector<1x32xf32>
    %c0_4 = arith.constant 0 : index
    %c0_5 = arith.constant 0 : index
    %3 = vector.load %arg4[%c0_4, %c0_5] : memref<1x32xf32, #tpu.memory_space<vmem>>, vector<1x32xf32>
    %c0_6 = arith.constant 0 : index
    %c0_7 = arith.constant 0 : index
    %4 = vector.load %arg5[%c0_6, %c0_7] : memref<32x128xbf16, #tpu.memory_space<vmem>>, vector<32x128xbf16>
    %c0_8 = arith.constant 0 : index
    %c0_9 = arith.constant 0 : index
    %5 = vector.load %arg6[%c0_8, %c0_9] : memref<1x128xf32, #tpu.memory_space<vmem>>, vector<1x128xf32>
    %c0_10 = arith.constant 0 : index
    %c0_11 = arith.constant 0 : index
    %6 = vector.load %arg7[%c0_10, %c0_11] : memref<128x32xbf16, #tpu.memory_space<vmem>>, vector<128x32xbf16>
    %c0_12 = arith.constant 0 : index
    %c0_13 = arith.constant 0 : index
    %7 = vector.load %arg8[%c0_12, %c0_13] : memref<1x32xf32, #tpu.memory_space<vmem>>, vector<1x32xf32>
    %cst = arith.constant dense<0.000000e+00> : vector<16xf32>
    %8 = vector.multi_reduction <add>, %1, %cst [1] : vector<16x32xf32> to vector<16xf32>
    %9 = vector.shape_cast %8 : vector<16xf32> to vector<16x1xf32>
    %cst_14 = arith.constant 3.200000e+01 : f32
    %10 = vector.broadcast %cst_14 : f32 to vector<16x1xf32>
    %11 = arith.divf %9, %10 : vector<16x1xf32>
    %12 = vector.broadcast %11 : vector<16x1xf32> to vector<16x32xf32>
    %13 = arith.subf %1, %12 : vector<16x32xf32>
    %14 = arith.mulf %13, %13 : vector<16x32xf32>
    %cst_15 = arith.constant dense<0.000000e+00> : vector<16xf32>
    %15 = vector.multi_reduction <add>, %14, %cst_15 [1] : vector<16x32xf32> to vector<16xf32>
    %16 = vector.shape_cast %15 : vector<16xf32> to vector<16x1xf32>
    %cst_16 = arith.constant 3.200000e+01 : f32
    %17 = vector.broadcast %cst_16 : f32 to vector<16x1xf32>
    %18 = arith.divf %16, %17 : vector<16x1xf32>
    %19 = vector.broadcast %11 : vector<16x1xf32> to vector<16x32xf32>
    %20 = arith.subf %1, %19 : vector<16x32xf32>
    %cst_17 = arith.constant 9.99999974E-6 : f32
    %21 = vector.broadcast %cst_17 : f32 to vector<16x1xf32>
    %22 = arith.addf %18, %21 : vector<16x1xf32>
    %23 = math.rsqrt %22 : vector<16x1xf32>
    %24 = vector.broadcast %23 : vector<16x1xf32> to vector<16x32xf32>
    %25 = arith.mulf %20, %24 : vector<16x32xf32>
    %26 = vector.broadcast %2 : vector<1x32xf32> to vector<16x32xf32>
    %27 = arith.mulf %25, %26 : vector<16x32xf32>
    %28 = vector.broadcast %3 : vector<1x32xf32> to vector<16x32xf32>
    %29 = arith.addf %27, %28 : vector<16x32xf32>
    %30 = arith.truncf %29 : vector<16x32xf32> to vector<16x32xbf16>
    %cst_18 = arith.constant dense<0.000000e+00> : vector<16x128xf32>
    %31 = tpu.matmul %30, %4, %cst_18 {dimension_numbers = #tpu.dot_dimension_numbers<[1], [0], [0], [1], [0, 0, 1, 1], [], []>} : vector<16x32xbf16>, vector<32x128xbf16>, vector<16x128xf32> -> vector<16x128xf32>
    %32 = vector.broadcast %5 : vector<1x128xf32> to vector<16x128xf32>
    %33 = arith.addf %31, %32 : vector<16x128xf32>
    %cst_19 = arith.constant 0.000000e+00 : f32
    %34 = vector.broadcast %cst_19 : f32 to vector<16x128xf32>
    %35 = arith.subf %34, %33 : vector<16x128xf32>
    %36 = math.exp %35 : vector<16x128xf32>
    %cst_20 = arith.constant 1.000000e+00 : f32
    %37 = vector.broadcast %cst_20 : f32 to vector<16x128xf32>
    %38 = arith.addf %37, %36 : vector<16x128xf32>
    %cst_21 = arith.constant 1.000000e+00 : f32
    %39 = vector.broadcast %cst_21 : f32 to vector<16x128xf32>
    %40 = arith.divf %39, %38 : vector<16x128xf32>
    %41 = arith.mulf %33, %40 : vector<16x128xf32>
    %42 = arith.truncf %41 : vector<16x128xf32> to vector<16x128xbf16>
    %cst_22 = arith.constant dense<0.000000e+00> : vector<16x32xf32>
    %43 = tpu.matmul %42, %6, %cst_22 {dimension_numbers = #tpu.dot_dimension_numbers<[1], [0], [0], [1], [0, 0, 1, 1], [], []>} : vector<16x128xbf16>, vector<128x32xbf16>, vector<16x32xf32> -> vector<16x32xf32>
    %44 = vector.broadcast %7 : vector<1x32xf32> to vector<16x32xf32>
    %45 = arith.addf %43, %44 : vector<16x32xf32>
    %cst_23 = arith.constant 5.000000e-01 : f32
    %46 = vector.broadcast %cst_23 : f32 to vector<16x32xf32>
    %47 = arith.mulf %46, %45 : vector<16x32xf32>
    %48 = arith.addf %1, %47 : vector<16x32xf32>
    %c0_24 = arith.constant 0 : index
    %c0_25 = arith.constant 0 : index
    %c0_26 = arith.constant 0 : index
    %49 = vector.load %arg9[%c0_24, %c0_25, %c0_26] : memref<1x16x32xf32, #tpu.memory_space<vmem>>, vector<1x16x32xf32>
    %50 = vector.shape_cast %49 : vector<1x16x32xf32> to vector<16x32xf32>
    %51 = vector.shape_cast %48 : vector<16x32xf32> to vector<1x16x32xf32>
    tpu.vector_store %arg9[%c0_24, %c0_25, %c0_26], %51 {strides = array<i32>} : memref<1x16x32xf32, #tpu.memory_space<vmem>>, vector<1x16x32xf32>,
    return
  }
  func.func @transform_0(%arg0: i32, %arg1: i32) -> (i32, i32, i32) {
    %c0_i32 = arith.constant 0 : i32
    %c0_i32_0 = arith.constant 0 : i32
    return %arg0, %arg1, %c0_i32 : i32, i32, i32
  }
  func.func @transform_1(%arg0: i32, %arg1: i32) -> (i32, i32) {
    %c0_i32 = arith.constant 0 : i32
    %c0_i32_0 = arith.constant 0 : i32
    %c0_i32_1 = arith.constant 0 : i32
    return %c0_i32, %c0_i32_0 : i32, i32
  }
  func.func @transform_2(%arg0: i32, %arg1: i32) -> (i32, i32) {
    %c0_i32 = arith.constant 0 : i32
    %c0_i32_0 = arith.constant 0 : i32
    %c0_i32_1 = arith.constant 0 : i32
    return %c0_i32, %c0_i32_0 : i32, i32
  }
  func.func @transform_3(%arg0: i32, %arg1: i32) -> (i32, i32) {
    %c0_i32 = arith.constant 0 : i32
    %c0_i32_0 = arith.constant 0 : i32
    %c0_i32_1 = arith.constant 0 : i32
    return %c0_i32, %c0_i32_0 : i32, i32
  }
  func.func @transform_4(%arg0: i32, %arg1: i32) -> (i32, i32) {
    %c0_i32 = arith.constant 0 : i32
    %c0_i32_0 = arith.constant 0 : i32
    %c0_i32_1 = arith.constant 0 : i32
    return %c0_i32, %c0_i32_0 : i32, i32
  }
  func.func @transform_5(%arg0: i32, %arg1: i32) -> (i32, i32) {
    %c0_i32 = arith.constant 0 : i32
    %c0_i32_0 = arith.constant 0 : i32
    %c0_i32_1 = arith.constant 0 : i32
    return %c0_i32, %c0_i32_0 : i32, i32
  }
  func.func @transform_6(%arg0: i32, %arg1: i32) -> (i32, i32) {
    %c0_i32 = arith.constant 0 : i32
    %c0_i32_0 = arith.constant 0 : i32
    %c0_i32_1 = arith.constant 0 : i32
    return %c0_i32, %c0_i32_0 : i32, i32
  }
  func.func @transform_7(%arg0: i32, %arg1: i32) -> (i32, i32, i32) {
    %c0_i32 = arith.constant 0 : i32
    %c0_i32_0 = arith.constant 0 : i32
    return %arg0, %arg1, %c0_i32 : i32, i32, i32
  }
}

</mosaic_0001>

<llo_original>
// kernel: tpu_custom_call.1
$region0: #{tpu_custom_call.1}
  #allocation0 [shape = 'u32[]', space=smem, size = 0x4, offset = 0x4, fixed_abs, tag = 'smem constant byte address 0x4 - core index']
  #allocation1 [shape = 'u32[144,128]{1,0:T(1,128)}', space=vmem, size = 0x12000, scoped, tag = 'internal scratch']
  %s0 = inlined_call_operand.vmem [shape: f32[2,16,32], index: 0, kind: input, shape index: {}]
  %s1 = inlined_call_operand.vmem [shape: f32[1,32], index: 1, kind: input, shape index: {}]
  %s2 = inlined_call_operand.vmem [shape: f32[1,32], index: 2, kind: input, shape index: {}]
  %s3 = inlined_call_operand.vmem [shape: bf16[32,128], index: 3, kind: input, shape index: {}]
  %s4 = inlined_call_operand.vmem [shape: f32[1,128], index: 4, kind: input, shape index: {}]
  %s5 = inlined_call_operand.vmem [shape: bf16[128,32], index: 5, kind: input, shape index: {}]
  %s6 = inlined_call_operand.vmem [shape: f32[1,32], index: 6, kind: input, shape index: {}]
  %s7 = inlined_call_operand.hbm [shape: f32[2,16,32], index: 7, kind: output, shape index: {}]
  %s8 = sld [smem:[#allocation0]]
  $region61: #{tpu_custom_call.1} parent=0
    _
  %s10 = ssub.s32 1, %s8
  %s11 = scalar_select 0, %s10, %s8
  $region1: #{tpu_custom_call.1} parent=0
    #allocation2 [shape = 'u8[16384]{0}', space=vmem, size = 0x4000, scoped, tag = 'output window, operand 0']
    #allocation3 [shape = 's32[2]{0}', space=sflag, size = 0x8, scoped, tag = 'scoped memory for tpu_custom_call.1']
    %12 = vsyncpa [#allocation3], 0
    %s13 = scalar_lea.sflag [#allocation3], 1
    %14 = vsyncpa %s13, 0
    loop: start=0, step=1, limit=4
    $region2: #{tpu_custom_call.1} parent=1 // loop_pre_header
      _
    $region3: #{tpu_custom_call.1} parent=1 // loop_header
      %s16 = sphi 0, %s20
      %p17 = scmp.ge.s32.totalorder %s16, 4
      %s23 = sphi 0, %s35
      %s24 = sphi 0, %s31
      %s25 = sphi 0, %s23
      %s26 = sphi 0, %s24
      %s27 = sphi 0, %s25
      %s28 = sphi 0, %s26
      %s40 = sphi 0, %s42
      %s43 = sphi 0, %s40
      %s44 = sphi 0, %s43
      %s60 = sphi 0, %s44
      %s64 = sphi 0, %s64
      %s66 = sphi 0, %s64
      %s67 = sphi 0, %s66
      %s81 = sphi 0, %s67
      %s85 = sphi 0, %s85
      %s87 = sphi 0, %s85
      %s88 = sphi 0, %s87
      %s102 = sphi 0, %s88
      %s106 = sphi 0, %s106
      %s108 = sphi 0, %s106
      %s109 = sphi 0, %s108
      %s123 = sphi 0, %s109
      %s127 = sphi 0, %s127
      %s129 = sphi 0, %s127
      %s130 = sphi 0, %s129
      %s144 = sphi 0, %s130
      %s148 = sphi 0, %s148
      %s150 = sphi 0, %s148
      %s151 = sphi 0, %s150
      %s165 = sphi 0, %s151
      %s169 = sphi 0, %s169
      %s171 = sphi 0, %s169
      %s172 = sphi 0, %s171
      %s186 = sphi 0, %s172
      %s194 = sphi 0, %s196
      %s197 = sphi 0, %s194
      %s198 = sphi 0, %s197
      %s214 = sphi 0, %s198
    $region4: #{tpu_custom_call.1} parent=1 // loop_header_branch
      %19 = sbr.rel (%p17) target = $region8
    $region5: #{tpu_custom_call.1} parent=1 // loop_body
      %s21 = ssub.s32 %s16, 1
      %s22 = ssub.s32 %s16, 2
      %s29 = sadd.s32 1, %s24
      %p30 = scmp.ge.s32.totalorder %s29, 1
      %s31 = scalar_select %p30, 0, %s29
      %s32 = sadd.s32 1, %s23
      %s33 = scalar_select %p30, %s32, %s23
      %p34 = scmp.ge.s32.totalorder %s33, 2
      %s35 = scalar_select %p34, 0, %s33
      %s36 = ssub.s32 %s23, %s35
      %s37 = ssub.s32 %s24, %s31
      %s38 = sor.u32 %s36, %s37
      %p39 = scmp.eq.s32.totalorder %s38, 0
      %s41 = sadd.s32 %s40, 1
      %s42 = scalar_select %p39, %s40, %s41
      %p45 = pneg %p39
      %p46 = scmp.eq.s32.totalorder %s16, 1
      %p47 = por %p45, %p46
      %p48 = scmp.ne.s32.totalorder %s40, %s43
      %p49 = scmp.eq.s32.totalorder %s16, 0
      %p50 = por %p48, %p49
      %p51 = scmp.ne.s32.totalorder %s40, %s43
      %p52 = scmp.eq.s32.totalorder %s21, 1
      %p53 = por %p51, %p52
      %p54 = scmp.ne.s32.totalorder %s43, %s44
      %p55 = scmp.eq.s32.totalorder %s21, 0
      %p56 = por %p54, %p55
      %p57 = scmp.ne.s32.totalorder %s43, %s44
      %p58 = scmp.eq.s32.totalorder %s22, 1
      %p59 = por %p57, %p58
      %p61 = scmp.ne.s32.totalorder %s44, %s60
      %p62 = scmp.eq.s32.totalorder %s22, 0
      %p63 = por %p61, %p62
      %s65 = sadd.s32 %s64, 1
      %p68 = scmp.eq.s32.totalorder %s16, 1
      %p69 = scmp.ne.s32.totalorder %s64, %s66
      %p70 = scmp.eq.s32.totalorder %s16, 0
      %p71 = por %p69, %p70
      %p72 = scmp.ne.s32.totalorder %s64, %s66
      %p73 = scmp.eq.s32.totalorder %s21, 1
      %p74 = por %p72, %p73
      %p75 = scmp.ne.s32.totalorder %s66, %s67
      %p76 = scmp.eq.s32.totalorder %s21, 0
      %p77 = por %p75, %p76
      %p78 = scmp.ne.s32.totalorder %s66, %s67
      %p79 = scmp.eq.s32.totalorder %s22, 1
      %p80 = por %p78, %p79
      %p82 = scmp.ne.s32.totalorder %s67, %s81
      %p83 = scmp.eq.s32.totalorder %s22, 0
      %p84 = por %p82, %p83
      %s86 = sadd.s32 %s85, 1
      %p89 = scmp.eq.s32.totalorder %s16, 1
      %p90 = scmp.ne.s32.totalorder %s85, %s87
      %p91 = scmp.eq.s32.totalorder %s16, 0
      %p92 = por %p90, %p91
      %p93 = scmp.ne.s32.totalorder %s85, %s87
      %p94 = scmp.eq.s32.totalorder %s21, 1
      %p95 = por %p93, %p94
      %p96 = scmp.ne.s32.totalorder %s87, %s88
      %p97 = scmp.eq.s32.totalorder %s21, 0
      %p98 = por %p96, %p97
      %p99 = scmp.ne.s32.totalorder %s87, %s88
      %p100 = scmp.eq.s32.totalorder %s22, 1
      %p101 = por %p99, %p100
      %p103 = scmp.ne.s32.totalorder %s88, %s102
      %p104 = scmp.eq.s32.totalorder %s22, 0
      %p105 = por %p103, %p104
      %s107 = sadd.s32 %s106, 1
      %p110 = scmp.eq.s32.totalorder %s16, 1
      %p111 = scmp.ne.s32.totalorder %s106, %s108
      %p112 = scmp.eq.s32.totalorder %s16, 0
      %p113 = por %p111, %p112
      %p114 = scmp.ne.s32.totalorder %s106, %s108
      %p115 = scmp.eq.s32.totalorder %s21, 1
      %p116 = por %p114, %p115
      %p117 = scmp.ne.s32.totalorder %s108, %s109
      %p118 = scmp.eq.s32.totalorder %s21, 0
      %p119 = por %p117, %p118
      %p120 = scmp.ne.s32.totalorder %s108, %s109
      %p121 = scmp.eq.s32.totalorder %s22, 1
      %p122 = por %p120, %p121
      %p124 = scmp.ne.s32.totalorder %s109, %s123
      %p125 = scmp.eq.s32.totalorder %s22, 0
      %p126 = por %p124, %p125
      %s128 = sadd.s32 %s127, 1
      %p131 = scmp.eq.s32.totalorder %s16, 1
      %p132 = scmp.ne.s32.totalorder %s127, %s129
      %p133 = scmp.eq.s32.totalorder %s16, 0
      %p134 = por %p132, %p133
      %p135 = scmp.ne.s32.totalorder %s127, %s129
      %p136 = scmp.eq.s32.totalorder %s21, 1
      %p137 = por %p135, %p136
      %p138 = scmp.ne.s32.totalorder %s129, %s130
      %p139 = scmp.eq.s32.totalorder %s21, 0
      %p140 = por %p138, %p139
      %p141 = scmp.ne.s32.totalorder %s129, %s130
      %p142 = scmp.eq.s32.totalorder %s22, 1
      %p143 = por %p141, %p142
      %p145 = scmp.ne.s32.totalorder %s130, %s144
      %p146 = scmp.eq.s32.totalorder %s22, 0
      %p147 = por %p145, %p146
      %s149 = sadd.s32 %s148, 1
      %p152 = scmp.eq.s32.totalorder %s16, 1
      %p153 = scmp.ne.s32.totalorder %s148, %s150
      %p154 = scmp.eq.s32.totalorder %s16, 0
      %p155 = por %p153, %p154
      %p156 = scmp.ne.s32.totalorder %s148, %s150
      %p157 = scmp.eq.s32.totalorder %s21, 1
      %p158 = por %p156, %p157
      %p159 = scmp.ne.s32.totalorder %s150, %s151
      %p160 = scmp.eq.s32.totalorder %s21, 0
      %p161 = por %p159, %p160
      %p162 = scmp.ne.s32.totalorder %s150, %s151
      %p163 = scmp.eq.s32.totalorder %s22, 1
      %p164 = por %p162, %p163
      %p166 = scmp.ne.s32.totalorder %s151, %s165
      %p167 = scmp.eq.s32.totalorder %s22, 0
      %p168 = por %p166, %p167
      %s170 = sadd.s32 %s169, 1
      %p173 = scmp.eq.s32.totalorder %s16, 1
      %p174 = scmp.ne.s32.totalorder %s169, %s171
      %p175 = scmp.eq.s32.totalorder %s16, 0
      %p176 = por %p174, %p175
      %p177 = scmp.ne.s32.totalorder %s169, %s171
      %p178 = scmp.eq.s32.totalorder %s21, 1
      %p179 = por %p177, %p178
      %p180 = scmp.ne.s32.totalorder %s171, %s172
      %p181 = scmp.eq.s32.totalorder %s21, 0
      %p182 = por %p180, %p181
      %p183 = scmp.ne.s32.totalorder %s171, %s172
      %p184 = scmp.eq.s32.totalorder %s22, 1
      %p185 = por %p183, %p184
      %p187 = scmp.ne.s32.totalorder %s172, %s186
      %p188 = scmp.eq.s32.totalorder %s22, 0
      %p189 = por %p187, %p188
      %s190 = ssub.s32 %s23, %s35
      %s191 = ssub.s32 %s24, %s31
      %s192 = sor.u32 %s190, %s191
      %p193 = scmp.eq.s32.totalorder %s192, 0
      %s195 = sadd.s32 %s194, 1
      %s196 = scalar_select %p193, %s194, %s195
      %p199 = pneg %p193
      %p200 = scmp.eq.s32.totalorder %s16, 1
      %p201 = por %p199, %p200
      %p202 = scmp.ne.s32.totalorder %s194, %s197
      %p203 = scmp.eq.s32.totalorder %s16, 0
      %p204 = por %p202, %p203
      %p205 = scmp.ne.s32.totalorder %s194, %s197
      %p206 = scmp.eq.s32.totalorder %s21, 1
      %p207 = por %p205, %p206
      %p208 = scmp.ne.s32.totalorder %s197, %s198
      %p209 = scmp.eq.s32.totalorder %s21, 0
      %p210 = por %p208, %p209
      %p211 = scmp.ne.s32.totalorder %s197, %s198
      %p212 = scmp.eq.s32.totalorder %s22, 1
      %p213 = por %p211, %p212
      %p215 = scmp.ne.s32.totalorder %s198, %s214
      %p216 = scmp.eq.s32.totalorder %s22, 0
      %p217 = por %p215, %p216
      %p218 = scmp.le.s32.totalorder 1, %s16
      %p219 = scmp.lt.s32.totalorder %s16, 3
      %p220 = pnand %p218, %p219
      %p221 = pneg %p220
      // Predicated region
      $region9: #{tpu_custom_call.1} parent=5 // pred_check
        _
      $region10: #{tpu_custom_call.1} parent=5 // pred_check_branch
        %223 = sbr.rel (%p220) target = $region12
      $region11: #{tpu_custom_call.1} parent=5 // pred_region
        %s224 = ssub.s32 %s16, 1
        // Predicated region
        $region13: #{tpu_custom_call.1} parent=11 // pred_check
          %p225 = pneg %p77
        $region14: #{tpu_custom_call.1} parent=11 // pred_check_branch
          %227 = sbr.rel (%p225) target = $region16
        $region15: #{tpu_custom_call.1} parent=11 // pred_region
          _
        $region16: #{tpu_custom_call.1} parent=11 // pred_fallthru
          _
        // Predicated region
        $region17: #{tpu_custom_call.1} parent=11 // pred_check
          %p228 = pneg %p98
        $region18: #{tpu_custom_call.1} parent=11 // pred_check_branch
          %230 = sbr.rel (%p228) target = $region20
        $region19: #{tpu_custom_call.1} parent=11 // pred_region
          _
        $region20: #{tpu_custom_call.1} parent=11 // pred_fallthru
          _
        // Predicated region
        $region21: #{tpu_custom_call.1} parent=11 // pred_check
          %p231 = pneg %p119
        $region22: #{tpu_custom_call.1} parent=11 // pred_check_branch
          %233 = sbr.rel (%p231) target = $region24
        $region23: #{tpu_custom_call.1} parent=11 // pred_region
          _
        $region24: #{tpu_custom_call.1} parent=11 // pred_fallthru
          _
        // Predicated region
        $region25: #{tpu_custom_call.1} parent=11 // pred_check
          %p234 = pneg %p140
        $region26: #{tpu_custom_call.1} parent=11 // pred_check_branch
          %236 = sbr.rel (%p234) target = $region28
        $region27: #{tpu_custom_call.1} parent=11 // pred_region
          _
        $region28: #{tpu_custom_call.1} parent=11 // pred_fallthru
          _
        // Predicated region
        $region29: #{tpu_custom_call.1} parent=11 // pred_check
          %p237 = pneg %p161
        $region30: #{tpu_custom_call.1} parent=11 // pred_check_branch
          %239 = sbr.rel (%p237) target = $region32
        $region31: #{tpu_custom_call.1} parent=11 // pred_region
          _
        $region32: #{tpu_custom_call.1} parent=11 // pred_fallthru
          _
        // Predicated region
        $region33: #{tpu_custom_call.1} parent=11 // pred_check
          %p240 = pneg %p182
        $region34: #{tpu_custom_call.1} parent=11 // pred_check_branch
          %242 = sbr.rel (%p240) target = $region36
        $region35: #{tpu_custom_call.1} parent=11 // pred_region
          _
        $region36: #{tpu_custom_call.1} parent=11 // pred_fallthru
          _
      $region12: #{tpu_custom_call.1} parent=5 // pred_fallthru
        _
      %p243 = scmp.lt.s32.totalorder %s16, 2
      // Predicated region
      $region37: #{tpu_custom_call.1} parent=5 // pred_check
        %p244 = pneg %p243
      $region38: #{tpu_custom_call.1} parent=5 // pred_check_branch
        %246 = sbr.rel (%p244) target = $region40
      $region39: #{tpu_custom_call.1} parent=5 // pred_region
        // Predicated region
        $region41: #{tpu_custom_call.1} parent=39 // pred_check
          %p247 = pneg %p50
        $region42: #{tpu_custom_call.1} parent=39 // pred_check_branch
          %249 = sbr.rel (%p247) target = $region44
        $region43: #{tpu_custom_call.1} parent=39 // pred_region
          %s250 = smul.u32 2, %s24
          %p251 = scmp.lt.s32.totalorder %s23, 1
          %s252 = scalar_select %p251, %s23, 1
          %p253 = scmp.lt.s32.totalorder %s250, 1
          %s254 = scalar_select %p253, %s250, 1
          %s255 = smul.addr %s252, 2
          %s256 = sadd.s32 %s254, %s255
          %s257 = smul.addr %s256, 8
          %s258 = scalar_lea.vmem %s0, %s257
          %s259 = smul.u32 2, %s24
        $region44: #{tpu_custom_call.1} parent=39 // pred_fallthru
          _
      $region40: #{tpu_custom_call.1} parent=5 // pred_fallthru
        _
      %p260 = scmp.le.s32.totalorder 1, %s16
      %p261 = scmp.lt.s32.totalorder %s16, 3
      %p262 = pnand %p260, %p261
      %p263 = pneg %p262
      // Predicated region
      $region45: #{tpu_custom_call.1} parent=5 // pred_check
        _
      $region46: #{tpu_custom_call.1} parent=5 // pred_check_branch
        %265 = sbr.rel (%p262) target = $region48
      $region47: #{tpu_custom_call.1} parent=5 // pred_region
        %s266 = ssub.s32 %s16, 1
        %s267 = smul.u32 2, %s26
        %p268 = scmp.lt.s32.totalorder %s25, 1
        %s269 = scalar_select %p268, %s25, 1
        %p270 = scmp.lt.s32.totalorder %s267, 1
        %s271 = scalar_select %p270, %s267, 1
        %s272 = smul.addr %s269, 2
        %s273 = sadd.s32 %s271, %s272
        %s274 = smul.addr %s273, 8
        %s275 = scalar_lea.vmem %s0, %s274
        %p276 = pneg %p56
        %p277 = pneg %p53
        %p278 = pneg %p77
        %p279 = pneg %p74
        %p280 = pneg %p98
        %p281 = pneg %p95
        %p282 = pneg %p119
        %p283 = pneg %p116
        %p284 = pneg %p140
        %p285 = pneg %p137
        %p286 = pneg %p161
        %p287 = pneg %p158
        %p288 = pneg %p182
        %p289 = pneg %p179
        %p290 = pneg %p210
        %p291 = pneg %p207
        %s292 = sand.u32 %s197, 1
        %s293 = scalar_lea.sflag [#allocation3], %s292
        %s294 = sand.u32 %s197, 1
        %s295 = smul.addr %s294, 16
        %s296 = scalar_lea.vmem [#allocation2], %s295
        %s297 = smul.u32 2, %s26
        %p298 = scmp.lt.s32.totalorder %s25, 1
        %s299 = scalar_select %p298, %s25, 1
        %p300 = scmp.lt.s32.totalorder %s297, 1
        %s301 = scalar_select %p300, %s297, 1
        %s302 = smul.addr %s299, 2
        %s303 = sadd.s32 %s301, %s302
        %s304 = smul.addr %s303, 8
        %s305 = scalar_lea.vmem %s0, %s304
        %s306 = smul.u32 2, %s26
        %s307 = smul.u32 2, %s26
        %v309 = vld [vmem:[%s305] sm:$0xff]
        %v310 = vld [vmem:[%s305 + $0x8] sm:$0xff]
        %v311 = vld [vmem:[%s1] sm:$0x1]
        %v312 = vld [vmem:[%s2] sm:$0x1]
        %v313 = vld [vmem:[%s3] sm:$0xf]
        %v314 = vld [vmem:[%s3 + $0x4] sm:$0xf]
        %v315 = vld [vmem:[%s3 + $0x8] sm:$0xf]
        %v316 = vld [vmem:[%s3 + $0xc] sm:$0xf]
        %v317 = vld [vmem:[%s4] sm:$0x1]
        %v318 = vld [vmem:[%s5] sm:$0xf]
        %v319 = vld [vmem:[%s5 + $0x4] sm:$0xf]
        %v320 = vld [vmem:[%s5 + $0x8] sm:$0xf]
        %v321 = vld [vmem:[%s5 + $0xc] sm:$0xf]
        %v322 = vld [vmem:[%s5 + $0x10] sm:$0xf]
        %v323 = vld [vmem:[%s5 + $0x14] sm:$0xf]
        %v324 = vld [vmem:[%s5 + $0x18] sm:$0xf]
        %v325 = vld [vmem:[%s5 + $0x1c] sm:$0xf]
        %v326 = vld [vmem:[%s5 + $0x20] sm:$0xf]
        %v327 = vld [vmem:[%s5 + $0x24] sm:$0xf]
        %v328 = vld [vmem:[%s5 + $0x28] sm:$0xf]
        %v329 = vld [vmem:[%s5 + $0x2c] sm:$0xf]
        %v330 = vld [vmem:[%s5 + $0x30] sm:$0xf]
        %v331 = vld [vmem:[%s5 + $0x34] sm:$0xf]
        %v332 = vld [vmem:[%s5 + $0x38] sm:$0xf]
        %v333 = vld [vmem:[%s5 + $0x3c] sm:$0xf]
        %v334 = vld [vmem:[%s6] sm:$0x1]
        %vm335 = vcmask 261120
        %v336 = vsel %vm335, %v309, 0.0
        %337 = vadd.xlane.f32.xlu0 %v336
        %v338 = vpop.xlane.xlu0 %337
        %v339 = vsel %vm335, %v310, 0.0
        %340 = vadd.xlane.f32.xlu0 %v339
        %v341 = vpop.xlane.xlu0 %340
        %v342 = vrcp.pop 32.0
        %v343 = vmul.f32 %v338, %v342
        %v344 = vmul.f32 %v341, %v342
        %v345 = vsub.f32 %v309, %v343
        %v346 = vsub.f32 %v310, %v344
        %v347 = vmul.f32 %v345, %v345
        %v348 = vmul.f32 %v346, %v346
        %v349 = vsel %vm335, %v347, 0.0
        %350 = vadd.xlane.f32.xlu0 %v349
        %v351 = vpop.xlane.xlu0 %350
        %v352 = vsel %vm335, %v348, 0.0
        %353 = vadd.xlane.f32.xlu0 %v352
        %v354 = vpop.xlane.xlu0 %353
        %v355 = vmul.f32 %v351, %v342
        %v356 = vmul.f32 %v354, %v342
        %v357 = vadd.f32 %v355, 1e-05
        %v358 = vadd.f32 %v356, 1e-05
        %v359 = vrsqrt.pop %v357
        %v360 = vrsqrt.pop %v358
        %v361 = vmul.f32 %v345, %v359
        %v362 = vmul.f32 %v346, %v360
        %v364 = vlaneseq
        %v365 = vshrl.u32 %v364, 7
        %v366 = vsub.s32 0, %v365
        %v367 = vrot.slane %v311, %v366
        %v369 = vmul.f32 %v361, %v367
        %v370 = vmul.f32 %v362, %v367
        %v372 = vlaneseq
        %v373 = vshrl.u32 %v372, 7
        %v374 = vsub.s32 0, %v373
        %v375 = vrot.slane %v312, %v374
        %v377 = vadd.f32 %v369, %v375
        %v378 = vadd.f32 %v370, %v375
        %v379 = vpack.c.bf16 %v378, %v377
        %v381 = vlaneseq
        %v382 = vshrl.u32 %v381, 7
        %v383 = vsub.s32 0, %v382
        %v384 = vrot.slane %v317, %v383
        %v390 = vunpack.c.l.b16 %v313
        %v391 = vunpack.c.l.b16 %v314
        %v392 = vunpack.c.l.b16 %v315
        %v393 = vunpack.c.l.b16 %v316
        %v394 = vpack.c.b16 %v391, %v390
        %v395 = vpack.c.b16 %v393, %v392
        %v399 = vsel %vm335, %v379, 0
        %401 = vmatprep.subr.bf16.mxu0 0
        %402 = vmatpush1.bf16.msra.mxu0 0
        %403 = vmatprep.subr.bf16.mxu0 0
        %404 = vmatpush1.bf16.msra.mxu0 0
        %405 = vmatprep.subr.bf16.mxu0 0
        %406 = vmatpush1.bf16.msra.mxu0 0
        %407 = vmatprep.subr.bf16.mxu0 0
        %408 = vmatpush1.bf16.msra.mxu0 0
        %409 = vmatprep.subr.bf16.mxu0 0
        %410 = vmatpush1.bf16.msra.mxu0 0
        %411 = vmatprep.subr.bf16.mxu0 0
        %412 = vmatpush1.bf16.msra.mxu0 0
        %413 = vmatprep.subr.bf16.mxu0 0
        %414 = vmatpush1.bf16.msra.mxu0 %v395
        %415 = vmatprep.subr.bf16.mxu0 0
        %416 = vmatpush1.bf16.msra.mxu0 %v394
        %417 = vmatprep.subr.bf16.mxu0 0
        %418 = vmatpush2.bf16.msra.mxu0 0
        %419 = vmatprep.subr.bf16.mxu0 0
        %420 = vmatpush2.bf16.msra.mxu0 0
        %421 = vmatprep.subr.bf16.mxu0 0
        %422 = vmatpush2.bf16.msra.mxu0 0
        %423 = vmatprep.subr.bf16.mxu0 0
        %424 = vmatpush2.bf16.msra.mxu0 0
        %425 = vmatprep.subr.bf16.mxu0 0
        %426 = vmatpush2.bf16.msra.mxu0 0
        %427 = vmatprep.subr.bf16.mxu0 0
        %428 = vmatpush2.bf16.msra.mxu0 0
        %429 = vmatprep.subr.bf16.mxu0 0
        %430 = vmatpush2.bf16.msra.mxu0 0
        %431 = vmatprep.subr.bf16.mxu0 0
        %432 = vmatpush2.bf16.msra.mxu0 0
        %433 = vmatprep.mubr.bf16.mxu0 0
        %434 = vmatmul.mubr.bf16.gmra.mxu0 %v399
        %v435 = vpop.f32.mrf.mxu0
        %v436 = vadd.f32 %v384, %v435
        %v437 = vpop.f32.mrf.mxu0
        %v438 = vpop.f32.mrf.mxu0
        %v439 = vadd.f32 %v384, %v438
        %v440 = vpop.f32.mrf.mxu0
        %441 = vdwg.mxu0
        %v442 = vsub.f32 0.0, %v436
        %v443 = vsub.f32 0.0, %v439
        %v444 = vmul.f32 %v442, 1.442695
        %v445 = vpow.pop %v444
        %v446 = vmul.f32 %v443, 1.442695
        %v447 = vpow.pop %v446
        %v448 = vadd.f32 %v445, 1.0
        %v449 = vadd.f32 %v447, 1.0
        %v450 = vrcp.pop %v448
        %v451 = vmul.f32 1.0, %v450
        %v452 = vrcp.pop %v449
        %v453 = vmul.f32 1.0, %v452
        %v454 = vmul.f32 %v436, %v451
        %v455 = vmul.f32 %v439, %v453
        %v456 = vpack.c.bf16 %v455, %v454
        %v458 = vlaneseq
        %v459 = vshrl.u32 %v458, 7
        %v460 = vsub.s32 0, %v459
        %v461 = vrot.slane %v334, %v460
        %v479 = vunpack.c.l.b16 %v318
        %v480 = vunpack.c.l.b16 %v319
        %v481 = vunpack.c.l.b16 %v320
        %v482 = vunpack.c.l.b16 %v321
        %v483 = vunpack.c.l.b16 %v322
        %v484 = vunpack.c.l.b16 %v323
        %v485 = vunpack.c.l.b16 %v324
        %v486 = vunpack.c.l.b16 %v325
        %v487 = vunpack.c.l.b16 %v326
        %v488 = vunpack.c.l.b16 %v327
        %v489 = vunpack.c.l.b16 %v328
        %v490 = vunpack.c.l.b16 %v329
        %v491 = vunpack.c.l.b16 %v330
        %v492 = vunpack.c.l.b16 %v331
        %v493 = vunpack.c.l.b16 %v332
        %v494 = vunpack.c.l.b16 %v333
        %v495 = vpack.c.b16 %v480, %v479
        %v496 = vpack.c.b16 %v482, %v481
        %v497 = vpack.c.b16 %v484, %v483
        %v498 = vpack.c.b16 %v486, %v485
        %v499 = vpack.c.b16 %v488, %v487
        %v500 = vpack.c.b16 %v490, %v489
        %v501 = vpack.c.b16 %v492, %v491
        %v502 = vpack.c.b16 %v494, %v493
        %511 = vmatprep.subr.bf16.mxu0 0
        %512 = vmatpush1.bf16.msra.mxu0 %v502
        %513 = vmatprep.subr.bf16.mxu0 0
        %514 = vmatpush1.bf16.msra.mxu0 %v501
        %515 = vmatprep.subr.bf16.mxu0 0
        %516 = vmatpush1.bf16.msra.mxu0 %v500
        %517 = vmatprep.subr.bf16.mxu0 0
        %518 = vmatpush1.bf16.msra.mxu0 %v499
        %519 = vmatprep.subr.bf16.mxu0 0
        %520 = vmatpush1.bf16.msra.mxu0 %v498
        %521 = vmatprep.subr.bf16.mxu0 0
        %522 = vmatpush1.bf16.msra.mxu0 %v497
        %523 = vmatprep.subr.bf16.mxu0 0
        %524 = vmatpush1.bf16.msra.mxu0 %v496
        %525 = vmatprep.subr.bf16.mxu0 0
        %526 = vmatpush1.bf16.msra.mxu0 %v495
        %527 = vmatprep.subr.bf16.mxu0 0
        %528 = vmatpush2.bf16.msra.mxu0 0
        %529 = vmatprep.subr.bf16.mxu0 0
        %530 = vmatpush2.bf16.msra.mxu0 0
        %531 = vmatprep.subr.bf16.mxu0 0
        %532 = vmatpush2.bf16.msra.mxu0 0
        %533 = vmatprep.subr.bf16.mxu0 0
        %534 = vmatpush2.bf16.msra.mxu0 0
        %535 = vmatprep.subr.bf16.mxu0 0
        %536 = vmatpush2.bf16.msra.mxu0 0
        %537 = vmatprep.subr.bf16.mxu0 0
        %538 = vmatpush2.bf16.msra.mxu0 0
        %539 = vmatprep.subr.bf16.mxu0 0
        %540 = vmatpush2.bf16.msra.mxu0 0
        %541 = vmatprep.subr.bf16.mxu0 0
        %542 = vmatpush2.bf16.msra.mxu0 0
        %543 = vmatprep.mubr.bf16.mxu0 0
        %544 = vmatmul.mubr.bf16.gmra.mxu0 %v456
        %v545 = vpop.f32.mrf.mxu0
        %v546 = vadd.f32 %v461, %v545
        %v547 = vpop.f32.mrf.mxu0
        %v548 = vpop.f32.mrf.mxu0
        %v549 = vadd.f32 %v461, %v548
        %v550 = vpop.f32.mrf.mxu0
        %551 = vdwg.mxu0
        %v552 = vmul.f32 %v546, 0.5
        %v553 = vmul.f32 %v549, 0.5
        %v554 = vadd.f32 %v309, %v552
        %v555 = vadd.f32 %v310, %v553
        %556 = vst.msk [vmem:[%s296] sm:$0xff] %vm335, %v554
        %557 = vst.msk [vmem:[%s296 + $0x8] sm:$0xff] %vm335, %v555
        %s558 = sand.u32 %s197, 1
        %s559 = scalar_lea.sflag [#allocation3], %s558
        %s560 = sand.u32 %s197, 1
        %s561 = smul.addr %s560, 16
        %s562 = scalar_lea.vmem [#allocation2], %s561
        // Predicated region
        $region49: #{tpu_custom_call.1} parent=47 // pred_check
          %p563 = pneg %p207
        $region50: #{tpu_custom_call.1} parent=47 // pred_check_branch
          %565 = sbr.rel (%p563) target = $region52
        $region51: #{tpu_custom_call.1} parent=47 // pred_region
          %s566 = smul.u32 2, %s26
          %s568 = ssub.s32 256, 256
          %569 = vsyncadd %s559, %s568
          %s570 = smul.addr %s25, 2
          %s571 = sadd.s32 %s566, %s570
          %s572 = smul.addr %s571, 128
          %s573 = scalar_lea.hbm %s7, %s572
          %s574 = sshll.u32 %s562, 4
          %s575 = int_to_ptr.vmem [resolvable:$true] %s574
          %580 = dma.vmem_to_hbm [thread:$0]  %s575, 256, %s573, %s559, 128, 128, 8
        $region52: #{tpu_custom_call.1} parent=47 // pred_fallthru
          _
      $region48: #{tpu_custom_call.1} parent=5 // pred_fallthru
        _
      %p581 = scmp.le.s32.totalorder 2, %s16
      // Predicated region
      $region53: #{tpu_custom_call.1} parent=5 // pred_check
        %p582 = pneg %p581
      $region54: #{tpu_custom_call.1} parent=5 // pred_check_branch
        %584 = sbr.rel (%p582) target = $region56
      $region55: #{tpu_custom_call.1} parent=5 // pred_region
        %s585 = ssub.s32 %s16, 2
        // Predicated region
        $region57: #{tpu_custom_call.1} parent=55 // pred_check
          %p586 = pneg %p213
        $region58: #{tpu_custom_call.1} parent=55 // pred_check_branch
          %588 = sbr.rel (%p586) target = $region60
        $region59: #{tpu_custom_call.1} parent=55 // pred_region
          %s589 = sand.u32 %s198, 1
          %s590 = scalar_lea.sflag [#allocation3], %s589
          %s591 = sand.u32 %s198, 1
          %s592 = smul.addr %s591, 16
          %s593 = scalar_lea.vmem [#allocation2], %s592
          %594 = dma.done %s590, 256
        $region60: #{tpu_custom_call.1} parent=55 // pred_fallthru
          _
      $region56: #{tpu_custom_call.1} parent=5 // pred_fallthru
        _
    $region6: #{tpu_custom_call.1} parent=1 // loop_footer
      %s20 = sadd.s32 1, %s16
    $region7: #{tpu_custom_call.1} parent=1 // loop_footer_branch
      %15 = sbr.rel target = $region3
    $region8: #{tpu_custom_call.1} parent=1 // loop_exit
      _
    %595 = vsyncpa [#allocation3], 1
    %s596 = scalar_lea.sflag [#allocation3], 1
    %597 = vsyncpa %s596, 1

</llo_original>
